<compile_context>
chip_gen: v7x
topology: tpu7x:2x2x1
jax: 0.10.0
libtpu: 0.0.40
codegen_flags: <defaults>
</compile_context>

<pallas_src>
import functools

import jax
import jax.numpy as jnp
import numpy as np
from jax import lax
from jax.experimental import pallas as pl
from jax.experimental.pallas import tpu as pltpu


def _attn_kernel(q_ref, k_ref, v_ref, wq_ref, wk_ref, wv_ref, *rest,
                 scale, has_mask, compute_dtype):
    if has_mask:
        mask_ref, o_ref, kp_sc, vp_sc = rest
    else:
        mask_ref = None
        o_ref, kp_sc, vp_sc = rest

    cd = compute_dtype

    # K/V projections once per batch element (first query tile); the (J, H)
    # results persist in VMEM scratch across the query-tile grid axis.  The
    # K/V BlockSpecs return the same block index across that axis, so Pallas
    # does not re-DMA them either.
    @pl.when(pl.program_id(1) == 0)
    def _():
        kp_sc[...] = jnp.dot(k_ref[...].astype(cd), wk_ref[...].astype(cd),
                             preferred_element_type=jnp.float32)
        vp_sc[...] = jnp.dot(v_ref[...].astype(cd), wv_ref[...].astype(cd),
                             preferred_element_type=jnp.float32)

    # Q projection for this query tile.
    qp = jnp.dot(q_ref[...].astype(cd), wq_ref[...].astype(cd),
                 preferred_element_type=jnp.float32)          # (tq, H)

    # Scores: contract over the hidden axis directly (no explicit transpose).
    s = lax.dot_general(qp.astype(cd), kp_sc[...].astype(cd),
                        (((1,), (1,)), ((), ())),
                        preferred_element_type=jnp.float32) * scale   # (tq, J)
    if has_mask:
        s = s + mask_ref[...]

    # Numerically-stable softmax over keys (f32).
    m = jnp.max(s, axis=-1, keepdims=True)
    p = jnp.exp(s - m)
    l = jnp.sum(p, axis=-1, keepdims=True)
    # EUP approximate reciprocal (co-issues with other units) + one Newton
    # step to recover full f32 accuracy on the softmax denominator.
    inv = pl.reciprocal(l, approx=True)
    inv = inv * (2.0 - l * inv)

    out = jnp.dot(p.astype(cd), vp_sc[...].astype(cd),
                  preferred_element_type=jnp.float32) * inv
    o_ref[...] = out.astype(o_ref.dtype)


def _pick_query_tile(L):
    """Largest query tile that divides L (bounds per-step VMEM on v7x)."""
    for t in (512, 256, 128, 64, 32, 16, 8):
        if L % t == 0:
            return t
    return L  # irregular small L: whole extent (allowed: block == full dim)


def attention(q, k, v, wq, wk, wv, mask=None, *, compute_dtype=jnp.float32):
    """Pallas TPU forward of `Attention`.

    q: (B, L, D); k, v: (B, J, D); wq/wk/wv: (D, H); mask: (B, L, J) or None.
    Returns (B, L, H) float32.
    """
    B, L, D = q.shape
    J = k.shape[1]
    H = wq.shape[1]

    tq = _pick_query_tile(L)
    n_qt = L // tq if L % tq == 0 else 1
    if L % tq != 0:
        tq = L

    scale = 1.0 / float(H) ** 0.5
    has_mask = mask is not None

    kernel = functools.partial(_attn_kernel, scale=scale, has_mask=has_mask,
                               compute_dtype=compute_dtype)

    # Leading size-1 batch dim is squeezed out of every block (None entry).
    in_specs = [
        pl.BlockSpec((None, tq, D), lambda b, i: (b, i, 0)),   # q tile
        pl.BlockSpec((None, J, D), lambda b, i: (b, 0, 0)),    # k (reused)
        pl.BlockSpec((None, J, D), lambda b, i: (b, 0, 0)),    # v (reused)
        pl.BlockSpec((D, H), lambda b, i: (0, 0)),             # Wq (shared)
        pl.BlockSpec((D, H), lambda b, i: (0, 0)),             # Wk (shared)
        pl.BlockSpec((D, H), lambda b, i: (0, 0)),             # Wv (shared)
    ]
    inputs = [q, k, v, wq, wk, wv]
    if has_mask:
        in_specs.append(pl.BlockSpec((None, tq, J), lambda b, i: (b, i, 0)))
        inputs.append(mask)

    flops = int(B * (2 * L * D * H + 4 * J * D * H + 4 * L * J * H))
    bytes_accessed = int(4 * (B * (L * D + 2 * J * D + L * H) + 3 * D * H
                              + (B * L * J if has_mask else 0)))
    cost = pl.CostEstimate(flops=flops,
                           transcendentals=int(B * L * J),
                           bytes_accessed=bytes_accessed)

    # TODO(synk): for very long key sequences, also tile J with an
    # online-softmax accumulator so VMEM stays O(tq*tk) instead of O(tq*J).
    grid_spec = pltpu.PrefetchScalarGridSpec(
        num_scalar_prefetch=0,
        grid=(B, n_qt),
        in_specs=in_specs,
        out_specs=pl.BlockSpec((None, tq, H), lambda b, i: (b, i, 0)),
        scratch_shapes=[pltpu.VMEM((J, H), jnp.float32),   # projected K
                        pltpu.VMEM((J, H), jnp.float32)],  # projected V
    )

    return pl.pallas_call(
        kernel,
        out_shape=jax.ShapeDtypeStruct((B, L, H), jnp.float32),
        grid_spec=grid_spec,
        compiler_params=pltpu.CompilerParams(
            dimension_semantics=("parallel", "arbitrary"),
            vmem_limit_bytes=32 * 1024 * 1024),
        cost_estimate=cost,
    )(*inputs)


def attention_ref(q, k, v, wq, wk, wv, mask=None):
    """Pure-JAX reference mirroring the PyTorch forward."""
    H = wq.shape[1]
    qp = q @ wq
    kp = k @ wk
    vp = v @ wv
    x = jnp.einsum('bld,bjd->blj', qp, kp) / H ** 0.5
    if mask is not None:
        x = x + mask
    x = jax.nn.softmax(x, axis=-1)
    return jnp.einsum('blj,bjd->bld', x, vp)


if __name__ == "__main__":
    # Small shapes consistent with the module: batch=2, seq=8, d_model=32,
    # n_hidden=32.
    B, L, J, D, H = 2, 8, 8, 32, 32

    key = jax.random.PRNGKey(0)
    k_q, k_k, k_v, k_wq, k_wk, k_wv, k_m = jax.random.split(key, 7)

    q = jax.random.normal(k_q, (B, L, D), dtype=jnp.float32)
    k = jax.random.normal(k_k, (B, J, D), dtype=jnp.float32)
    v = jax.random.normal(k_v, (B, J, D), dtype=jnp.float32)

    # Deterministic parameter init (nn.Linear(d_model, n_hidden, bias=False),
    # stored transposed as (d_model, n_hidden)).
    bound = 1.0 / np.sqrt(D)
    wq = jax.random.uniform(k_wq, (D, H), jnp.float32, -bound, bound)
    wk = jax.random.uniform(k_wk, (D, H), jnp.float32, -bound, bound)
    wv = jax.random.uniform(k_wv, (D, H), jnp.float32, -bound, bound)

    # Path 1: no mask (no zero-mask stream is materialized).
    out = jax.block_until_ready(attention(q, k, v, wq, wk, wv, mask=None))
    exp = attention_ref(q, k, v, wq, wk, wv, mask=None)
    np.testing.assert_allclose(np.asarray(out), np.asarray(exp),
                               rtol=2e-5, atol=2e-5)

    # Path 2: additive mask.
    mask = jax.random.normal(k_m, (B, L, J), dtype=jnp.float32)
    out_m = jax.block_until_ready(attention(q, k, v, wq, wk, wv, mask=mask))
    exp_m = attention_ref(q, k, v, wq, wk, wv, mask=mask)
    np.testing.assert_allclose(np.asarray(out_m), np.asarray(exp_m),
                               rtol=2e-5, atol=2e-5)

    print("KERNEL_OK")
</pallas_src>

<mosaic_0001>
module attributes {stable_mosaic.version = 11 : i64} {
  func.func @_attn_kernel(%arg0: i32, %arg1: i32, %arg2: memref<1x8x32xf32, #tpu.memory_space<vmem>>, %arg3: memref<1x8x32xf32, #tpu.memory_space<vmem>>, %arg4: memref<1x8x32xf32, #tpu.memory_space<vmem>>, %arg5: memref<32x32xf32, #tpu.memory_space<vmem>>, %arg6: memref<32x32xf32, #tpu.memory_space<vmem>>, %arg7: memref<32x32xf32, #tpu.memory_space<vmem>>, %arg8: memref<1x8x32xf32, #tpu.memory_space<vmem>>, %arg9: memref<8x32xf32, #tpu.memory_space<vmem>>, %arg10: memref<8x32xf32, #tpu.memory_space<vmem>>) attributes {dimension_semantics = [#tpu.dimension_semantics<parallel>, #tpu.dimension_semantics<arbitrary>], iteration_bounds = array<i64: 2, 1>, scalar_prefetch = 0 : i64, scratch_operands = 2 : i64, tpu.core_type = #tpu.core_type<tc>, window_params = [{transform_indices = @transform_0, window_bounds = array<i64: 1, 8, 32>}, {transform_indices = @transform_1, window_bounds = array<i64: 1, 8, 32>}, {transform_indices = @transform_2, window_bounds = array<i64: 1, 8, 32>}, {pipeline_mode = #tpu.pipeline_mode<synchronous>, transform_indices = @transform_3, window_bounds = array<i64: 32, 32>}, {pipeline_mode = #tpu.pipeline_mode<synchronous>, transform_indices = @transform_4, window_bounds = array<i64: 32, 32>}, {pipeline_mode = #tpu.pipeline_mode<synchronous>, transform_indices = @transform_5, window_bounds = array<i64: 32, 32>}, {transform_indices = @transform_6, window_bounds = array<i64: 1, 8, 32>}]} {
    %c0_i32 = arith.constant 0 : i32
    %0 = arith.cmpi eq, %arg1, %c0_i32 : i32
    %1 = arith.extui %0 : i1 to i32
    %c0_i32_0 = arith.constant 0 : i32
    %2 = arith.cmpi ne, %1, %c0_i32_0 : i32
    scf.if %2 {
      %c0_18 = arith.constant 0 : index
      %c0_19 = arith.constant 0 : index
      %c0_20 = arith.constant 0 : index
      %30 = vector.load %arg3[%c0_18, %c0_19, %c0_20] : memref<1x8x32xf32, #tpu.memory_space<vmem>>, vector<1x8x32xf32>
      %31 = vector.shape_cast %30 : vector<1x8x32xf32> to vector<8x32xf32>
      %c0_21 = arith.constant 0 : index
      %c0_22 = arith.constant 0 : index
      %32 = vector.load %arg6[%c0_21, %c0_22] : memref<32x32xf32, #tpu.memory_space<vmem>>, vector<32x32xf32>
      %cst_23 = arith.constant dense<0.000000e+00> : vector<8x32xf32>
      %33 = tpu.matmul %31, %32, %cst_23 {dimension_numbers = #tpu.dot_dimension_numbers<[1], [0], [0], [1], [0, 0, 1, 1], [], []>} : vector<8x32xf32>, vector<32x32xf32>, vector<8x32xf32> -> vector<8x32xf32>
      %c0_24 = arith.constant 0 : index
      %c0_25 = arith.constant 0 : index
      %34 = vector.load %arg9[%c0_24, %c0_25] : memref<8x32xf32, #tpu.memory_space<vmem>>, vector<8x32xf32>
      tpu.vector_store %arg9[%c0_24, %c0_25], %33 {strides = array<i32>} : memref<8x32xf32, #tpu.memory_space<vmem>>, vector<8x32xf32>,
      %c0_26 = arith.constant 0 : index
      %c0_27 = arith.constant 0 : index
      %c0_28 = arith.constant 0 : index
      %35 = vector.load %arg4[%c0_26, %c0_27, %c0_28] : memref<1x8x32xf32, #tpu.memory_space<vmem>>, vector<1x8x32xf32>
      %36 = vector.shape_cast %35 : vector<1x8x32xf32> to vector<8x32xf32>
      %c0_29 = arith.constant 0 : index
      %c0_30 = arith.constant 0 : index
      %37 = vector.load %arg7[%c0_29, %c0_30] : memref<32x32xf32, #tpu.memory_space<vmem>>, vector<32x32xf32>
      %cst_31 = arith.constant dense<0.000000e+00> : vector<8x32xf32>
      %38 = tpu.matmul %36, %37, %cst_31 {dimension_numbers = #tpu.dot_dimension_numbers<[1], [0], [0], [1], [0, 0, 1, 1], [], []>} : vector<8x32xf32>, vector<32x32xf32>, vector<8x32xf32> -> vector<8x32xf32>
      %c0_32 = arith.constant 0 : index
      %c0_33 = arith.constant 0 : index
      %39 = vector.load %arg10[%c0_32, %c0_33] : memref<8x32xf32, #tpu.memory_space<vmem>>, vector<8x32xf32>
      tpu.vector_store %arg10[%c0_32, %c0_33], %38 {strides = array<i32>} : memref<8x32xf32, #tpu.memory_space<vmem>>, vector<8x32xf32>,
    } else {
    }
    %c0 = arith.constant 0 : index
    %c0_1 = arith.constant 0 : index
    %c0_2 = arith.constant 0 : index
    %3 = vector.load %arg2[%c0, %c0_1, %c0_2] : memref<1x8x32xf32, #tpu.memory_space<vmem>>, vector<1x8x32xf32>
    %4 = vector.shape_cast %3 : vector<1x8x32xf32> to vector<8x32xf32>
    %c0_3 = arith.constant 0 : index
    %c0_4 = arith.constant 0 : index
    %5 = vector.load %arg5[%c0_3, %c0_4] : memref<32x32xf32, #tpu.memory_space<vmem>>, vector<32x32xf32>
    %cst = arith.constant dense<0.000000e+00> : vector<8x32xf32>
    %6 = tpu.matmul %4, %5, %cst {dimension_numbers = #tpu.dot_dimension_numbers<[1], [0], [0], [1], [0, 0, 1, 1], [], []>} : vector<8x32xf32>, vector<32x32xf32>, vector<8x32xf32> -> vector<8x32xf32>
    %c0_5 = arith.constant 0 : index
    %c0_6 = arith.constant 0 : index
    %7 = vector.load %arg9[%c0_5, %c0_6] : memref<8x32xf32, #tpu.memory_space<vmem>>, vector<8x32xf32>
    %cst_7 = arith.constant dense<0.000000e+00> : vector<8x8xf32>
    %8 = tpu.matmul %6, %7, %cst_7 {dimension_numbers = #tpu.dot_dimension_numbers<[1], [1], [0], [0], [0, 0, 1, 0], [], []>} : vector<8x32xf32>, vector<8x32xf32>, vector<8x8xf32> -> vector<8x8xf32>
    %cst_8 = arith.constant 0.176776692 : f32
    %9 = vector.broadcast %cst_8 : f32 to vector<8x8xf32>
    %10 = arith.mulf %8, %9 : vector<8x8xf32>
    %cst_9 = arith.constant dense<0xFF800000> : vector<8xf32>
    %11 = vector.multi_reduction <maximumf>, %10, %cst_9 [1] : vector<8x8xf32> to vector<8xf32>
    %12 = vector.shape_cast %11 : vector<8xf32> to vector<8x1xf32>
    %13 = vector.broadcast %12 : vector<8x1xf32> to vector<8x8xf32>
    %14 = arith.subf %10, %13 : vector<8x8xf32>
    %15 = math.exp %14 : vector<8x8xf32>
    %cst_10 = arith.constant dense<0.000000e+00> : vector<8xf32>
    %16 = vector.multi_reduction <add>, %15, %cst_10 [1] : vector<8x8xf32> to vector<8xf32>
    %17 = vector.shape_cast %16 : vector<8xf32> to vector<8x1xf32>
    %18 = tpu.reciprocal %17 {approx = true} : vector<8x1xf32> -> vector<8x1xf32>
    %19 = arith.mulf %17, %18 : vector<8x1xf32>
    %cst_11 = arith.constant 2.000000e+00 : f32
    %20 = vector.broadcast %cst_11 : f32 to vector<8x1xf32>
    %21 = arith.subf %20, %19 : vector<8x1xf32>
    %22 = arith.mulf %18, %21 : vector<8x1xf32>
    %c0_12 = arith.constant 0 : index
    %c0_13 = arith.constant 0 : index
    %23 = vector.load %arg10[%c0_12, %c0_13] : memref<8x32xf32, #tpu.memory_space<vmem>>, vector<8x32xf32>
    %cst_14 = arith.constant dense<0.000000e+00> : vector<8x32xf32>
    %24 = tpu.matmul %15, %23, %cst_14 {dimension_numbers = #tpu.dot_dimension_numbers<[1], [0], [0], [1], [0, 0, 1, 1], [], []>} : vector<8x8xf32>, vector<8x32xf32>, vector<8x32xf32> -> vector<8x32xf32>
    %25 = vector.broadcast %22 : vector<8x1xf32> to vector<8x32xf32>
    %26 = arith.mulf %24, %25 : vector<8x32xf32>
    %c0_15 = arith.constant 0 : index
    %c0_16 = arith.constant 0 : index
    %c0_17 = arith.constant 0 : index
    %27 = vector.load %arg8[%c0_15, %c0_16, %c0_17] : memref<1x8x32xf32, #tpu.memory_space<vmem>>, vector<1x8x32xf32>
    %28 = vector.shape_cast %27 : vector<1x8x32xf32> to vector<8x32xf32>
    %29 = vector.shape_cast %26 : vector<8x32xf32> to vector<1x8x32xf32>
    tpu.vector_store %arg8[%c0_15, %c0_16, %c0_17], %29 {strides = array<i32>} : memref<1x8x32xf32, #tpu.memory_space<vmem>>, vector<1x8x32xf32>,
    return
  }
  func.func @transform_0(%arg0: i32, %arg1: i32) -> (i32, i32, i32) {
    %c0_i32 = arith.constant 0 : i32
    %c0_i32_0 = arith.constant 0 : i32
    return %arg0, %arg1, %c0_i32 : i32, i32, i32
  }
  func.func @transform_1(%arg0: i32, %arg1: i32) -> (i32, i32, i32) {
    %c0_i32 = arith.constant 0 : i32
    %c0_i32_0 = arith.constant 0 : i32
    %c0_i32_1 = arith.constant 0 : i32
    return %arg0, %c0_i32, %c0_i32_0 : i32, i32, i32
  }
  func.func @transform_2(%arg0: i32, %arg1: i32) -> (i32, i32, i32) {
    %c0_i32 = arith.constant 0 : i32
    %c0_i32_0 = arith.constant 0 : i32
    %c0_i32_1 = arith.constant 0 : i32
    return %arg0, %c0_i32, %c0_i32_0 : i32, i32, i32
  }
  func.func @transform_3(%arg0: i32, %arg1: i32) -> (i32, i32) {
    %c0_i32 = arith.constant 0 : i32
    %c0_i32_0 = arith.constant 0 : i32
    %c0_i32_1 = arith.constant 0 : i32
    return %c0_i32, %c0_i32_0 : i32, i32
  }
  func.func @transform_4(%arg0: i32, %arg1: i32) -> (i32, i32) {
    %c0_i32 = arith.constant 0 : i32
    %c0_i32_0 = arith.constant 0 : i32
    %c0_i32_1 = arith.constant 0 : i32
    return %c0_i32, %c0_i32_0 : i32, i32
  }
  func.func @transform_5(%arg0: i32, %arg1: i32) -> (i32, i32) {
    %c0_i32 = arith.constant 0 : i32
    %c0_i32_0 = arith.constant 0 : i32
    %c0_i32_1 = arith.constant 0 : i32
    return %c0_i32, %c0_i32_0 : i32, i32
  }
  func.func @transform_6(%arg0: i32, %arg1: i32) -> (i32, i32, i32) {
    %c0_i32 = arith.constant 0 : i32
    %c0_i32_0 = arith.constant 0 : i32
    return %arg0, %arg1, %c0_i32 : i32, i32, i32
  }
}

</mosaic_0001>

<llo_original>
// kernel: tpu_custom_call.1
$region0: #{tpu_custom_call.1}
  #allocation0 [shape = 'u32[]', space=smem, size = 0x4, offset = 0x4, fixed_abs, tag = 'smem constant byte address 0x4 - core index']
  #allocation1 [shape = 'u32[144,128]{1,0:T(1,128)}', space=vmem, size = 0x12000, scoped, tag = 'internal scratch']
  #allocation2 [shape = 'f32[8,32]{1,0:T(8,128)}', space=vmem, size = 0x1000, scoped, tag = 'scratch operand']
  #allocation3 [shape = 'f32[8,32]{1,0:T(8,128)}', space=vmem, size = 0x1000, scoped, tag = 'scratch operand']
  %s0 = inlined_call_operand.hbm [shape: f32[2,8,32], index: 0, kind: input, shape index: {}]
  %s1 = inlined_call_operand.hbm [shape: f32[2,8,32], index: 1, kind: input, shape index: {}]
  %s2 = inlined_call_operand.hbm [shape: f32[2,8,32], index: 2, kind: input, shape index: {}]
  %s3 = inlined_call_operand.hbm [shape: f32[32,32], index: 3, kind: input, shape index: {}]
  %s4 = inlined_call_operand.hbm [shape: f32[32,32], index: 4, kind: input, shape index: {}]
  %s5 = inlined_call_operand.hbm [shape: f32[32,32], index: 5, kind: input, shape index: {}]
  %s6 = inlined_call_operand.hbm [shape: f32[2,8,32], index: 6, kind: output, shape index: {}]
  %s7 = sld [smem:[#allocation0]]
  $region85: #{tpu_custom_call.1} parent=0
    _
  %s9 = ssub.s32 1, %s7
  %s10 = scalar_select 0, %s9, %s7
  $region1: #{tpu_custom_call.1} parent=0
    #allocation4 [shape = 'u8[8192]{0}', space=vmem, size = 0x2000, scoped, tag = 'input window, operand 0']
    #allocation5 [shape = 's32[2]{0}', space=sflag, size = 0x8, scoped, tag = 'scoped memory for tpu_custom_call.1']
    #allocation6 [shape = 's32[2]{0}', space=sflag, size = 0x8, scoped, tag = 'scoped memory for tpu_custom_call.1']
    #allocation7 [shape = 'u8[8192]{0}', space=vmem, size = 0x2000, scoped, tag = 'input window, operand 1']
    #allocation8 [shape = 's32[2]{0}', space=sflag, size = 0x8, scoped, tag = 'scoped memory for tpu_custom_call.1']
    #allocation9 [shape = 'u8[8192]{0}', space=vmem, size = 0x2000, scoped, tag = 'input window, operand 2']
    #allocation10 [shape = 'u8[16384]{0}', space=vmem, size = 0x4000, scoped, tag = 'input window, operand 3, single buffered']
    #allocation11 [shape = 's32[1]{0}', space=sflag, size = 0x4, scoped, tag = 'scoped memory for tpu_custom_call.1']
    #allocation12 [shape = 'u8[16384]{0}', space=vmem, size = 0x4000, scoped, tag = 'input window, operand 4, single buffered']
    #allocation13 [shape = 'u8[16384]{0}', space=vmem, size = 0x4000, scoped, tag = 'input window, operand 5, single buffered']
    #allocation14 [shape = 's32[1]{0}', space=sflag, size = 0x4, scoped, tag = 'scoped memory for tpu_custom_call.1']
    #allocation15 [shape = 'u8[8192]{0}', space=vmem, size = 0x2000, scoped, tag = 'output window, operand 0']
    %11 = vsyncpa [#allocation5], 0
    %s12 = scalar_lea.sflag [#allocation5], 1
    %13 = vsyncpa %s12, 0
    %14 = vsyncpa [#allocation8], 0
    %s15 = scalar_lea.sflag [#allocation8], 1
    %16 = vsyncpa %s15, 0
    %17 = vsyncpa [#allocation11], 0
    %18 = vsyncpa [#allocation14], 0
    %19 = vsyncpa [#allocation6], 0
    %s20 = scalar_lea.sflag [#allocation6], 1
    %21 = vsyncpa %s20, 0
    loop: start=0, step=1, limit=4
    $region2: #{tpu_custom_call.1} parent=1 // loop_pre_header
      _
    $region3: #{tpu_custom_call.1} parent=1 // loop_header
      %s23 = sphi 0, %s27
      %p24 = scmp.ge.s32.totalorder %s23, 4
      %s30 = sphi 0, %s42
      %s31 = sphi 0, %s38
      %s32 = sphi 0, %s30
      %s33 = sphi 0, %s31
      %s34 = sphi 0, %s32
      %s35 = sphi 0, %s33
      %s47 = sphi 0, %s49
      %s50 = sphi 0, %s47
      %s51 = sphi 0, %s50
      %s67 = sphi 0, %s51
      %s73 = sphi 0, %s75
      %s76 = sphi 0, %s73
      %s77 = sphi 0, %s76
      %s93 = sphi 0, %s77
      %s99 = sphi 0, %s101
      %s102 = sphi 0, %s99
      %s103 = sphi 0, %s102
      %s119 = sphi 0, %s103
      %s123 = sphi 0, %s123
      %s125 = sphi 0, %s123
      %s126 = sphi 0, %s125
      %s140 = sphi 0, %s126
      %s144 = sphi 0, %s144
      %s146 = sphi 0, %s144
      %s147 = sphi 0, %s146
      %s161 = sphi 0, %s147
      %s165 = sphi 0, %s165
      %s167 = sphi 0, %s165
      %s168 = sphi 0, %s167
      %s182 = sphi 0, %s168
      %s190 = sphi 0, %s192
      %s193 = sphi 0, %s190
      %s194 = sphi 0, %s193
      %s210 = sphi 0, %s194
    $region4: #{tpu_custom_call.1} parent=1 // loop_header_branch
      %26 = sbr.rel (%p24) target = $region8
    $region5: #{tpu_custom_call.1} parent=1 // loop_body
      %s28 = ssub.s32 %s23, 1
      %s29 = ssub.s32 %s23, 2
      %s36 = sadd.s32 1, %s31
      %p37 = scmp.ge.s32.totalorder %s36, 1
      %s38 = scalar_select %p37, 0, %s36
      %s39 = sadd.s32 1, %s30
      %s40 = scalar_select %p37, %s39, %s30
      %p41 = scmp.ge.s32.totalorder %s40, 2
      %s42 = scalar_select %p41, 0, %s40
      %s43 = ssub.s32 %s30, %s42
      %s44 = ssub.s32 %s31, %s38
      %s45 = sor.u32 %s43, %s44
      %p46 = scmp.eq.s32.totalorder %s45, 0
      %s48 = sadd.s32 %s47, 1
      %s49 = scalar_select %p46, %s47, %s48
      %p52 = pneg %p46
      %p53 = scmp.eq.s32.totalorder %s23, 1
      %p54 = por %p52, %p53
      %p55 = scmp.ne.s32.totalorder %s47, %s50
      %p56 = scmp.eq.s32.totalorder %s23, 0
      %p57 = por %p55, %p56
      %p58 = scmp.ne.s32.totalorder %s47, %s50
      %p59 = scmp.eq.s32.totalorder %s28, 1
      %p60 = por %p58, %p59
      %p61 = scmp.ne.s32.totalorder %s50, %s51
      %p62 = scmp.eq.s32.totalorder %s28, 0
      %p63 = por %p61, %p62
      %p64 = scmp.ne.s32.totalorder %s50, %s51
      %p65 = scmp.eq.s32.totalorder %s29, 1
      %p66 = por %p64, %p65
      %p68 = scmp.ne.s32.totalorder %s51, %s67
      %p69 = scmp.eq.s32.totalorder %s29, 0
      %p70 = por %p68, %p69
      %s71 = ssub.s32 %s30, %s42
      %p72 = scmp.eq.s32.totalorder %s71, 0
      %s74 = sadd.s32 %s73, 1
      %s75 = scalar_select %p72, %s73, %s74
      %p78 = pneg %p72
      %p79 = scmp.eq.s32.totalorder %s23, 1
      %p80 = por %p78, %p79
      %p81 = scmp.ne.s32.totalorder %s73, %s76
      %p82 = scmp.eq.s32.totalorder %s23, 0
      %p83 = por %p81, %p82
      %p84 = scmp.ne.s32.totalorder %s73, %s76
      %p85 = scmp.eq.s32.totalorder %s28, 1
      %p86 = por %p84, %p85
      %p87 = scmp.ne.s32.totalorder %s76, %s77
      %p88 = scmp.eq.s32.totalorder %s28, 0
      %p89 = por %p87, %p88
      %p90 = scmp.ne.s32.totalorder %s76, %s77
      %p91 = scmp.eq.s32.totalorder %s29, 1
      %p92 = por %p90, %p91
      %p94 = scmp.ne.s32.totalorder %s77, %s93
      %p95 = scmp.eq.s32.totalorder %s29, 0
      %p96 = por %p94, %p95
      %s97 = ssub.s32 %s30, %s42
      %p98 = scmp.eq.s32.totalorder %s97, 0
      %s100 = sadd.s32 %s99, 1
      %s101 = scalar_select %p98, %s99, %s100
      %p104 = pneg %p98
      %p105 = scmp.eq.s32.totalorder %s23, 1
      %p106 = por %p104, %p105
      %p107 = scmp.ne.s32.totalorder %s99, %s102
      %p108 = scmp.eq.s32.totalorder %s23, 0
      %p109 = por %p107, %p108
      %p110 = scmp.ne.s32.totalorder %s99, %s102
      %p111 = scmp.eq.s32.totalorder %s28, 1
      %p112 = por %p110, %p111
      %p113 = scmp.ne.s32.totalorder %s102, %s103
      %p114 = scmp.eq.s32.totalorder %s28, 0
      %p115 = por %p113, %p114
      %p116 = scmp.ne.s32.totalorder %s102, %s103
      %p117 = scmp.eq.s32.totalorder %s29, 1
      %p118 = por %p116, %p117
      %p120 = scmp.ne.s32.totalorder %s103, %s119
      %p121 = scmp.eq.s32.totalorder %s29, 0
      %p122 = por %p120, %p121
      %s124 = sadd.s32 %s123, 1
      %p127 = scmp.eq.s32.totalorder %s23, 1
      %p128 = scmp.ne.s32.totalorder %s123, %s125
      %p129 = scmp.eq.s32.totalorder %s23, 0
      %p130 = por %p128, %p129
      %p131 = scmp.ne.s32.totalorder %s123, %s125
      %p132 = scmp.eq.s32.totalorder %s28, 1
      %p133 = por %p131, %p132
      %p134 = scmp.ne.s32.totalorder %s125, %s126
      %p135 = scmp.eq.s32.totalorder %s28, 0
      %p136 = por %p134, %p135
      %p137 = scmp.ne.s32.totalorder %s125, %s126
      %p138 = scmp.eq.s32.totalorder %s29, 1
      %p139 = por %p137, %p138
      %p141 = scmp.ne.s32.totalorder %s126, %s140
      %p142 = scmp.eq.s32.totalorder %s29, 0
      %p143 = por %p141, %p142
      %s145 = sadd.s32 %s144, 1
      %p148 = scmp.eq.s32.totalorder %s23, 1
      %p149 = scmp.ne.s32.totalorder %s144, %s146
      %p150 = scmp.eq.s32.totalorder %s23, 0
      %p151 = por %p149, %p150
      %p152 = scmp.ne.s32.totalorder %s144, %s146
      %p153 = scmp.eq.s32.totalorder %s28, 1
      %p154 = por %p152, %p153
      %p155 = scmp.ne.s32.totalorder %s146, %s147
      %p156 = scmp.eq.s32.totalorder %s28, 0
      %p157 = por %p155, %p156
      %p158 = scmp.ne.s32.totalorder %s146, %s147
      %p159 = scmp.eq.s32.totalorder %s29, 1
      %p160 = por %p158, %p159
      %p162 = scmp.ne.s32.totalorder %s147, %s161
      %p163 = scmp.eq.s32.totalorder %s29, 0
      %p164 = por %p162, %p163
      %s166 = sadd.s32 %s165, 1
      %p169 = scmp.eq.s32.totalorder %s23, 1
      %p170 = scmp.ne.s32.totalorder %s165, %s167
      %p171 = scmp.eq.s32.totalorder %s23, 0
      %p172 = por %p170, %p171
      %p173 = scmp.ne.s32.totalorder %s165, %s167
      %p174 = scmp.eq.s32.totalorder %s28, 1
      %p175 = por %p173, %p174
      %p176 = scmp.ne.s32.totalorder %s167, %s168
      %p177 = scmp.eq.s32.totalorder %s28, 0
      %p178 = por %p176, %p177
      %p179 = scmp.ne.s32.totalorder %s167, %s168
      %p180 = scmp.eq.s32.totalorder %s29, 1
      %p181 = por %p179, %p180
      %p183 = scmp.ne.s32.totalorder %s168, %s182
      %p184 = scmp.eq.s32.totalorder %s29, 0
      %p185 = por %p183, %p184
      %s186 = ssub.s32 %s30, %s42
      %s187 = ssub.s32 %s31, %s38
      %s188 = sor.u32 %s186, %s187
      %p189 = scmp.eq.s32.totalorder %s188, 0
      %s191 = sadd.s32 %s190, 1
      %s192 = scalar_select %p189, %s190, %s191
      %p195 = pneg %p189
      %p196 = scmp.eq.s32.totalorder %s23, 1
      %p197 = por %p195, %p196
      %p198 = scmp.ne.s32.totalorder %s190, %s193
      %p199 = scmp.eq.s32.totalorder %s23, 0
      %p200 = por %p198, %p199
      %p201 = scmp.ne.s32.totalorder %s190, %s193
      %p202 = scmp.eq.s32.totalorder %s28, 1
      %p203 = por %p201, %p202
      %p204 = scmp.ne.s32.totalorder %s193, %s194
      %p205 = scmp.eq.s32.totalorder %s28, 0
      %p206 = por %p204, %p205
      %p207 = scmp.ne.s32.totalorder %s193, %s194
      %p208 = scmp.eq.s32.totalorder %s29, 1
      %p209 = por %p207, %p208
      %p211 = scmp.ne.s32.totalorder %s194, %s210
      %p212 = scmp.eq.s32.totalorder %s29, 0
      %p213 = por %p211, %p212
      %p214 = scmp.le.s32.totalorder 1, %s23
      %p215 = scmp.lt.s32.totalorder %s23, 3
      %p216 = pnand %p214, %p215
      %p217 = pneg %p216
      // Predicated region
      $region9: #{tpu_custom_call.1} parent=5 // pred_check
        _
      $region10: #{tpu_custom_call.1} parent=5 // pred_check_branch
        %219 = sbr.rel (%p216) target = $region12
      $region11: #{tpu_custom_call.1} parent=5 // pred_region
        %s220 = ssub.s32 %s23, 1
        // Predicated region
        $region13: #{tpu_custom_call.1} parent=11 // pred_check
          %p221 = pneg %p136
        $region14: #{tpu_custom_call.1} parent=11 // pred_check_branch
          %223 = sbr.rel (%p221) target = $region16
        $region15: #{tpu_custom_call.1} parent=11 // pred_region
          %s225 = ssub.s32 512, 512
          %226 = vsyncadd [#allocation11], %s225
          %s227 = sshll.u32 [#allocation10], 4
          %s228 = int_to_ptr.vmem [resolvable:$true] %s227
          %233 = dma.hbm_to_vmem [thread:$0]  %s3, 512, %s228, [#allocation11], 128, 128, 8
        $region16: #{tpu_custom_call.1} parent=11 // pred_fallthru
          _
        // Predicated region
        $region17: #{tpu_custom_call.1} parent=11 // pred_check
          %p234 = pneg %p157
        $region18: #{tpu_custom_call.1} parent=11 // pred_check_branch
          %236 = sbr.rel (%p234) target = $region20
        $region19: #{tpu_custom_call.1} parent=11 // pred_region
          %s238 = ssub.s32 512, 512
          %239 = vsyncadd [#allocation11], %s238
          %s240 = sshll.u32 [#allocation12], 4
          %s241 = int_to_ptr.vmem [resolvable:$true] %s240
          %246 = dma.hbm_to_vmem [thread:$0]  %s4, 512, %s241, [#allocation11], 128, 128, 8
        $region20: #{tpu_custom_call.1} parent=11 // pred_fallthru
          _
        // Predicated region
        $region21: #{tpu_custom_call.1} parent=11 // pred_check
          %p247 = pneg %p178
        $region22: #{tpu_custom_call.1} parent=11 // pred_check_branch
          %249 = sbr.rel (%p247) target = $region24
        $region23: #{tpu_custom_call.1} parent=11 // pred_region
          %s251 = ssub.s32 512, 512
          %252 = vsyncadd [#allocation14], %s251
          %s253 = sshll.u32 [#allocation13], 4
          %s254 = int_to_ptr.vmem [resolvable:$true] %s253
          %259 = dma.hbm_to_vmem [thread:$0]  %s5, 512, %s254, [#allocation14], 128, 128, 8
        $region24: #{tpu_custom_call.1} parent=11 // pred_fallthru
          _
      $region12: #{tpu_custom_call.1} parent=5 // pred_fallthru
        _
      %p260 = scmp.lt.s32.totalorder %s23, 2
      // Predicated region
      $region25: #{tpu_custom_call.1} parent=5 // pred_check
        %p261 = pneg %p260
      $region26: #{tpu_custom_call.1} parent=5 // pred_check_branch
        %263 = sbr.rel (%p261) target = $region28
      $region27: #{tpu_custom_call.1} parent=5 // pred_region
        // Predicated region
        $region29: #{tpu_custom_call.1} parent=27 // pred_check
          %p264 = pneg %p57
        $region30: #{tpu_custom_call.1} parent=27 // pred_check_branch
          %266 = sbr.rel (%p264) target = $region32
        $region31: #{tpu_custom_call.1} parent=27 // pred_region
          %s267 = sand.u32 %s47, 1
          %s268 = scalar_lea.sflag [#allocation5], %s267
          %s269 = sand.u32 %s47, 1
          %s270 = smul.addr %s269, 8
          %s271 = scalar_lea.vmem [#allocation4], %s270
          %s273 = ssub.s32 128, 128
          %274 = vsyncadd %s268, %s273
          %s275 = sadd.s32 %s31, %s30
          %s276 = smul.addr %s275, 128
          %s277 = scalar_lea.hbm %s0, %s276
          %s279 = sshll.u32 %s271, 4
          %s280 = int_to_ptr.vmem [resolvable:$true] %s279
          %282 = dma.hbm_to_vmem [thread:$0]  %s277, 128, %s280, %s268
        $region32: #{tpu_custom_call.1} parent=27 // pred_fallthru
          _
        // Predicated region
        $region33: #{tpu_custom_call.1} parent=27 // pred_check
          %p283 = pneg %p83
        $region34: #{tpu_custom_call.1} parent=27 // pred_check_branch
          %285 = sbr.rel (%p283) target = $region36
        $region35: #{tpu_custom_call.1} parent=27 // pred_region
          %s286 = sand.u32 %s23, 1
          %s287 = scalar_lea.sflag [#allocation8], %s286
          %s288 = sand.u32 %s73, 1
          %s289 = smul.addr %s288, 8
          %s290 = scalar_lea.vmem [#allocation7], %s289
          %s292 = ssub.s32 128, 128
          %293 = vsyncadd %s287, %s292
          %s294 = smul.addr %s30, 128
          %s295 = scalar_lea.hbm %s1, %s294
          %s297 = sshll.u32 %s290, 4
          %s298 = int_to_ptr.vmem [resolvable:$true] %s297
          %300 = dma.hbm_to_vmem [thread:$0]  %s295, 128, %s298, %s287
        $region36: #{tpu_custom_call.1} parent=27 // pred_fallthru
          _
        // Predicated region
        $region37: #{tpu_custom_call.1} parent=27 // pred_check
          %p301 = pneg %p109
        $region38: #{tpu_custom_call.1} parent=27 // pred_check_branch
          %303 = sbr.rel (%p301) target = $region40
        $region39: #{tpu_custom_call.1} parent=27 // pred_region
          %s304 = sand.u32 %s23, 1
          %s305 = scalar_lea.sflag [#allocation8], %s304
          %s306 = sand.u32 %s99, 1
          %s307 = smul.addr %s306, 8
          %s308 = scalar_lea.vmem [#allocation9], %s307
          %s310 = ssub.s32 128, 128
          %311 = vsyncadd %s305, %s310
          %s312 = smul.addr %s30, 128
          %s313 = scalar_lea.hbm %s2, %s312
          %s315 = sshll.u32 %s308, 4
          %s316 = int_to_ptr.vmem [resolvable:$true] %s315
          %318 = dma.hbm_to_vmem [thread:$0]  %s313, 128, %s316, %s305
        $region40: #{tpu_custom_call.1} parent=27 // pred_fallthru
          _
      $region28: #{tpu_custom_call.1} parent=5 // pred_fallthru
        _
      %p319 = scmp.le.s32.totalorder 1, %s23
      %p320 = scmp.lt.s32.totalorder %s23, 3
      %p321 = pnand %p319, %p320
      %p322 = pneg %p321
      // Predicated region
      $region41: #{tpu_custom_call.1} parent=5 // pred_check
        _
      $region42: #{tpu_custom_call.1} parent=5 // pred_check_branch
        %324 = sbr.rel (%p321) target = $region44
      $region43: #{tpu_custom_call.1} parent=5 // pred_region
        %s325 = ssub.s32 %s23, 1
        %s326 = sand.u32 %s50, 1
        %s327 = scalar_lea.sflag [#allocation5], %s326
        %s328 = sand.u32 %s50, 1
        %s329 = smul.addr %s328, 8
        %s330 = scalar_lea.vmem [#allocation4], %s329
        // Predicated region
        $region45: #{tpu_custom_call.1} parent=43 // pred_check
          %p331 = pneg %p63
        $region46: #{tpu_custom_call.1} parent=43 // pred_check_branch
          %333 = sbr.rel (%p331) target = $region48
        $region47: #{tpu_custom_call.1} parent=43 // pred_region
          %334 = dma.done %s327, 128
        $region48: #{tpu_custom_call.1} parent=43 // pred_fallthru
          _
        %s335 = sand.u32 %s28, 1
        %s336 = scalar_lea.sflag [#allocation8], %s335
        %s337 = sand.u32 %s76, 1
        %s338 = smul.addr %s337, 8
        %s339 = scalar_lea.vmem [#allocation7], %s338
        // Predicated region
        $region49: #{tpu_custom_call.1} parent=43 // pred_check
          %p340 = pneg %p89
        $region50: #{tpu_custom_call.1} parent=43 // pred_check_branch
          %342 = sbr.rel (%p340) target = $region52
        $region51: #{tpu_custom_call.1} parent=43 // pred_region
          %343 = dma.done %s336, 128
        $region52: #{tpu_custom_call.1} parent=43 // pred_fallthru
          _
        %s344 = sand.u32 %s28, 1
        %s345 = scalar_lea.sflag [#allocation8], %s344
        %s346 = sand.u32 %s102, 1
        %s347 = smul.addr %s346, 8
        %s348 = scalar_lea.vmem [#allocation9], %s347
        // Predicated region
        $region53: #{tpu_custom_call.1} parent=43 // pred_check
          %p349 = pneg %p115
        $region54: #{tpu_custom_call.1} parent=43 // pred_check_branch
          %351 = sbr.rel (%p349) target = $region56
        $region55: #{tpu_custom_call.1} parent=43 // pred_region
          %352 = dma.done %s345, 128
        $region56: #{tpu_custom_call.1} parent=43 // pred_fallthru
          _
        // Predicated region
        $region57: #{tpu_custom_call.1} parent=43 // pred_check
          %p353 = pneg %p136
        $region58: #{tpu_custom_call.1} parent=43 // pred_check_branch
          %355 = sbr.rel (%p353) target = $region60
        $region59: #{tpu_custom_call.1} parent=43 // pred_region
          %356 = dma.done [#allocation11], 512
        $region60: #{tpu_custom_call.1} parent=43 // pred_fallthru
          _
        // Predicated region
        $region61: #{tpu_custom_call.1} parent=43 // pred_check
          %p357 = pneg %p157
        $region62: #{tpu_custom_call.1} parent=43 // pred_check_branch
          %359 = sbr.rel (%p357) target = $region64
        $region63: #{tpu_custom_call.1} parent=43 // pred_region
          %360 = dma.done [#allocation11], 512
        $region64: #{tpu_custom_call.1} parent=43 // pred_fallthru
          _
        // Predicated region
        $region65: #{tpu_custom_call.1} parent=43 // pred_check
          %p361 = pneg %p178
        $region66: #{tpu_custom_call.1} parent=43 // pred_check_branch
          %363 = sbr.rel (%p361) target = $region68
        $region67: #{tpu_custom_call.1} parent=43 // pred_region
          %364 = dma.done [#allocation14], 512
        $region68: #{tpu_custom_call.1} parent=43 // pred_fallthru
          _
        %s365 = sand.u32 %s50, 1
        %s366 = scalar_lea.sflag [#allocation5], %s365
        %s367 = sand.u32 %s50, 1
        %s368 = smul.addr %s367, 8
        %s369 = scalar_lea.vmem [#allocation4], %s368
        %p370 = pneg %p63
        %p371 = pneg %p60
        %s372 = sand.u32 %s28, 1
        %s373 = scalar_lea.sflag [#allocation8], %s372
        %s374 = sand.u32 %s76, 1
        %s375 = smul.addr %s374, 8
        %s376 = scalar_lea.vmem [#allocation7], %s375
        %p377 = pneg %p89
        %p378 = pneg %p86
        %s379 = sand.u32 %s28, 1
        %s380 = scalar_lea.sflag [#allocation8], %s379
        %s381 = sand.u32 %s102, 1
        %s382 = smul.addr %s381, 8
        %s383 = scalar_lea.vmem [#allocation9], %s382
        %p384 = pneg %p115
        %p385 = pneg %p112
        %p386 = pneg %p136
        %p387 = pneg %p133
        %p388 = pneg %p157
        %p389 = pneg %p154
        %p390 = pneg %p178
        %p391 = pneg %p175
        %p392 = pneg %p206
        %p393 = pneg %p203
        %s394 = sand.u32 %s193, 1
        %s395 = scalar_lea.sflag [#allocation6], %s394
        %s396 = sand.u32 %s193, 1
        %s397 = smul.addr %s396, 8
        %s398 = scalar_lea.vmem [#allocation15], %s397
        %p399 = scmp.eq.s32.totalorder %s33, 0
        // Predicated region
        $region69: #{tpu_custom_call.1} parent=43 // pred_check
          %p400 = pneg %p399
        $region70: #{tpu_custom_call.1} parent=43 // pred_check_branch
          %402 = sbr.rel (%p400) target = $region72
        $region71: #{tpu_custom_call.1} parent=43 // pred_region
          %v403 = vld [vmem:[%s339] sm:$0xff]
          %v404 = vld [vmem:[#allocation12] sm:$0xff]
          %v405 = vld [vmem:[#allocation12 + $0x8] sm:$0xff]
          %v406 = vld [vmem:[#allocation12 + $0x10] sm:$0xff]
          %v407 = vld [vmem:[#allocation12 + $0x18] sm:$0xff]
          %vm408 = vcmask 261120
          %v410 = vsel %vm408, %v403, 0
          %412 = vmatprep.subr.mxu0 0.0
          %413 = vmatpush1.msra.mxu0 %v404
          %414 = vmatprep.subr.mxu0 0.0
          %415 = vmatpush1.msra.mxu0 %v405
          %416 = vmatprep.subr.mxu0 0.0
          %417 = vmatpush1.msra.mxu0 %v406
          %418 = vmatprep.subr.mxu0 0.0
          %419 = vmatpush1.msra.mxu0 %v407
          %420 = vmatprep.subr.mxu0 0.0
          %421 = vmatpush1.msra.mxu0 0.0
          %422 = vmatprep.subr.mxu0 0.0
          %423 = vmatpush1.msra.mxu0 0.0
          %424 = vmatprep.subr.mxu0 0.0
          %425 = vmatpush1.msra.mxu0 0.0
          %426 = vmatprep.subr.mxu0 0.0
          %427 = vmatpush1.msra.mxu0 0.0
          %428 = vmatprep.subr.mxu0 0.0
          %429 = vmatpush1.msra.mxu0 0.0
          %430 = vmatprep.subr.mxu0 0.0
          %431 = vmatpush1.msra.mxu0 0.0
          %432 = vmatprep.subr.mxu0 0.0
          %433 = vmatpush1.msra.mxu0 0.0
          %434 = vmatprep.subr.mxu0 0.0
          %435 = vmatpush1.msra.mxu0 0.0
          %436 = vmatprep.subr.mxu0 0.0
          %437 = vmatpush1.msra.mxu0 0.0
          %438 = vmatprep.subr.mxu0 0.0
          %439 = vmatpush1.msra.mxu0 0.0
          %440 = vmatprep.subr.mxu0 0.0
          %441 = vmatpush1.msra.mxu0 0.0
          %442 = vmatprep.subr.mxu0 0.0
          %443 = vmatpush1.msra.mxu0 0.0
          %444 = vmatprep.subr.mxu0 0.0
          %445 = vmatpush1.msra.mxu0 0.0
          %446 = vmatprep.subr.mxu0 0.0
          %447 = vmatpush1.msra.mxu0 0.0
          %448 = vmatprep.subr.mxu0 0.0
          %449 = vmatpush1.msra.mxu0 0.0
          %450 = vmatprep.subr.mxu0 0.0
          %451 = vmatpush1.msra.mxu0 0.0
          %452 = vmatprep.subr.mxu0 0.0
          %453 = vmatpush1.msra.mxu0 0.0
          %454 = vmatprep.subr.mxu0 0.0
          %455 = vmatpush1.msra.mxu0 0.0
          %456 = vmatprep.subr.mxu0 0.0
          %457 = vmatpush1.msra.mxu0 0.0
          %458 = vmatprep.subr.mxu0 0.0
          %459 = vmatpush1.msra.mxu0 0.0
          %460 = vmatprep.subr.mxu0 0.0
          %461 = vmatpush1.msra.mxu0 0.0
          %462 = vmatprep.subr.mxu0 0.0
          %463 = vmatpush1.msra.mxu0 0.0
          %464 = vmatprep.subr.mxu0 0.0
          %465 = vmatpush1.msra.mxu0 0.0
          %466 = vmatprep.subr.mxu0 0.0
          %467 = vmatpush1.msra.mxu0 0.0
          %468 = vmatprep.subr.mxu0 0.0
          %469 = vmatpush1.msra.mxu0 0.0
          %470 = vmatprep.subr.mxu0 0.0
          %471 = vmatpush1.msra.mxu0 0.0
          %472 = vmatprep.subr.mxu0 0.0
          %473 = vmatpush1.msra.mxu0 0.0
          %474 = vmatprep.subr.mxu0 0.0
          %475 = vmatpush1.msra.mxu0 0.0
          %476 = vmatprep.mubr.f32.mxu0 0.0
          %477 = vmatmul.mubr.f32.gmra.mrb[0].mxu0 %v410
          %v478 = vpop.f32.mrb[0].mxu0
          %v479 = vadd.f32 0.0, %v478
          %v480 = vpop.f32.mrb[0].mxu0
          %481 = vdwg.mxu0
          %482 = vst.msk [vmem:[#allocation2] sm:$0xff] %vm408, %v479
          %v483 = vld [vmem:[%s348] sm:$0xff]
          %v484 = vld [vmem:[#allocation13] sm:$0xff]
          %v485 = vld [vmem:[#allocation13 + $0x8] sm:$0xff]
          %v486 = vld [vmem:[#allocation13 + $0x10] sm:$0xff]
          %v487 = vld [vmem:[#allocation13 + $0x18] sm:$0xff]
          %v489 = vsel %vm408, %v483, 0
          %491 = vmatprep.subr.mxu0 0.0
          %492 = vmatpush1.msra.mxu0 %v484
          %493 = vmatprep.subr.mxu0 0.0
          %494 = vmatpush1.msra.mxu0 %v485
          %495 = vmatprep.subr.mxu0 0.0
          %496 = vmatpush1.msra.mxu0 %v486
          %497 = vmatprep.subr.mxu0 0.0
          %498 = vmatpush1.msra.mxu0 %v487
          %499 = vmatprep.subr.mxu0 0.0
          %500 = vmatpush1.msra.mxu0 0.0
          %501 = vmatprep.subr.mxu0 0.0
          %502 = vmatpush1.msra.mxu0 0.0
          %503 = vmatprep.subr.mxu0 0.0
          %504 = vmatpush1.msra.mxu0 0.0
          %505 = vmatprep.subr.mxu0 0.0
          %506 = vmatpush1.msra.mxu0 0.0
          %507 = vmatprep.subr.mxu0 0.0
          %508 = vmatpush1.msra.mxu0 0.0
          %509 = vmatprep.subr.mxu0 0.0
          %510 = vmatpush1.msra.mxu0 0.0
          %511 = vmatprep.subr.mxu0 0.0
          %512 = vmatpush1.msra.mxu0 0.0
          %513 = vmatprep.subr.mxu0 0.0
          %514 = vmatpush1.msra.mxu0 0.0
          %515 = vmatprep.subr.mxu0 0.0
          %516 = vmatpush1.msra.mxu0 0.0
          %517 = vmatprep.subr.mxu0 0.0
          %518 = vmatpush1.msra.mxu0 0.0
          %519 = vmatprep.subr.mxu0 0.0
          %520 = vmatpush1.msra.mxu0 0.0
          %521 = vmatprep.subr.mxu0 0.0
          %522 = vmatpush1.msra.mxu0 0.0
          %523 = vmatprep.subr.mxu0 0.0
          %524 = vmatpush1.msra.mxu0 0.0
          %525 = vmatprep.subr.mxu0 0.0
          %526 = vmatpush1.msra.mxu0 0.0
          %527 = vmatprep.subr.mxu0 0.0
          %528 = vmatpush1.msra.mxu0 0.0
          %529 = vmatprep.subr.mxu0 0.0
          %530 = vmatpush1.msra.mxu0 0.0
          %531 = vmatprep.subr.mxu0 0.0
          %532 = vmatpush1.msra.mxu0 0.0
          %533 = vmatprep.subr.mxu0 0.0
          %534 = vmatpush1.msra.mxu0 0.0
          %535 = vmatprep.subr.mxu0 0.0
          %536 = vmatpush1.msra.mxu0 0.0
          %537 = vmatprep.subr.mxu0 0.0
          %538 = vmatpush1.msra.mxu0 0.0
          %539 = vmatprep.subr.mxu0 0.0
          %540 = vmatpush1.msra.mxu0 0.0
          %541 = vmatprep.subr.mxu0 0.0
          %542 = vmatpush1.msra.mxu0 0.0
          %543 = vmatprep.subr.mxu0 0.0
          %544 = vmatpush1.msra.mxu0 0.0
          %545 = vmatprep.subr.mxu0 0.0
          %546 = vmatpush1.msra.mxu0 0.0
          %547 = vmatprep.subr.mxu0 0.0
          %548 = vmatpush1.msra.mxu0 0.0
          %549 = vmatprep.subr.mxu0 0.0
          %550 = vmatpush1.msra.mxu0 0.0
          %551 = vmatprep.subr.mxu0 0.0
          %552 = vmatpush1.msra.mxu0 0.0
          %553 = vmatprep.subr.mxu0 0.0
          %554 = vmatpush1.msra.mxu0 0.0
          %555 = vmatprep.mubr.f32.mxu0 0.0
          %556 = vmatmul.mubr.f32.gmra.mrb[0].mxu0 %v489
          %v557 = vpop.f32.mrb[0].mxu0
          %v558 = vadd.f32 0.0, %v557
          %v559 = vpop.f32.mrb[0].mxu0
          %560 = vdwg.mxu0
          %561 = vst.msk [vmem:[#allocation3] sm:$0xff] %vm408, %v558
        $region72: #{tpu_custom_call.1} parent=43 // pred_fallthru
          _
        %v562 = vld [vmem:[%s330] sm:$0xff]
        %v563 = vld [vmem:[#allocation10] sm:$0xff]
        %v564 = vld [vmem:[#allocation10 + $0x8] sm:$0xff]
        %v565 = vld [vmem:[#allocation10 + $0x10] sm:$0xff]
        %v566 = vld [vmem:[#allocation10 + $0x18] sm:$0xff]
        %vm567 = vcmask 261120
        %v569 = vsel %vm567, %v562, 0
        %571 = vmatprep.subr.mxu0 0.0
        %572 = vmatpush1.msra.mxu0 %v563
        %573 = vmatprep.subr.mxu0 0.0
        %574 = vmatpush1.msra.mxu0 %v564
        %575 = vmatprep.subr.mxu0 0.0
        %576 = vmatpush1.msra.mxu0 %v565
        %577 = vmatprep.subr.mxu0 0.0
        %578 = vmatpush1.msra.mxu0 %v566
        %579 = vmatprep.subr.mxu0 0.0
        %580 = vmatpush1.msra.mxu0 0.0
        %581 = vmatprep.subr.mxu0 0.0
        %582 = vmatpush1.msra.mxu0 0.0
        %583 = vmatprep.subr.mxu0 0.0
        %584 = vmatpush1.msra.mxu0 0.0
        %585 = vmatprep.subr.mxu0 0.0
        %586 = vmatpush1.msra.mxu0 0.0
        %587 = vmatprep.subr.mxu0 0.0
        %588 = vmatpush1.msra.mxu0 0.0
        %589 = vmatprep.subr.mxu0 0.0
        %590 = vmatpush1.msra.mxu0 0.0
        %591 = vmatprep.subr.mxu0 0.0
        %592 = vmatpush1.msra.mxu0 0.0
        %593 = vmatprep.subr.mxu0 0.0
        %594 = vmatpush1.msra.mxu0 0.0
        %595 = vmatprep.subr.mxu0 0.0
        %596 = vmatpush1.msra.mxu0 0.0
        %597 = vmatprep.subr.mxu0 0.0
        %598 = vmatpush1.msra.mxu0 0.0
        %599 = vmatprep.subr.mxu0 0.0
        %600 = vmatpush1.msra.mxu0 0.0
        %601 = vmatprep.subr.mxu0 0.0
        %602 = vmatpush1.msra.mxu0 0.0
        %603 = vmatprep.subr.mxu0 0.0
        %604 = vmatpush1.msra.mxu0 0.0
        %605 = vmatprep.subr.mxu0 0.0
        %606 = vmatpush1.msra.mxu0 0.0
        %607 = vmatprep.subr.mxu0 0.0
        %608 = vmatpush1.msra.mxu0 0.0
        %609 = vmatprep.subr.mxu0 0.0
        %610 = vmatpush1.msra.mxu0 0.0
        %611 = vmatprep.subr.mxu0 0.0
        %612 = vmatpush1.msra.mxu0 0.0
        %613 = vmatprep.subr.mxu0 0.0
        %614 = vmatpush1.msra.mxu0 0.0
        %615 = vmatprep.subr.mxu0 0.0
        %616 = vmatpush1.msra.mxu0 0.0
        %617 = vmatprep.subr.mxu0 0.0
        %618 = vmatpush1.msra.mxu0 0.0
        %619 = vmatprep.subr.mxu0 0.0
        %620 = vmatpush1.msra.mxu0 0.0
        %621 = vmatprep.subr.mxu0 0.0
        %622 = vmatpush1.msra.mxu0 0.0
        %623 = vmatprep.subr.mxu0 0.0
        %624 = vmatpush1.msra.mxu0 0.0
        %625 = vmatprep.subr.mxu0 0.0
        %626 = vmatpush1.msra.mxu0 0.0
        %627 = vmatprep.subr.mxu0 0.0
        %628 = vmatpush1.msra.mxu0 0.0
        %629 = vmatprep.subr.mxu0 0.0
        %630 = vmatpush1.msra.mxu0 0.0
        %631 = vmatprep.subr.mxu0 0.0
        %632 = vmatpush1.msra.mxu0 0.0
        %633 = vmatprep.subr.mxu0 0.0
        %634 = vmatpush1.msra.mxu0 0.0
        %635 = vmatprep.mubr.f32.mxu0 0.0
        %636 = vmatmul.mubr.f32.gmra.mrb[0].mxu0 %v569
        %v637 = vpop.f32.mrb[0].mxu0
        %v638 = vadd.f32 0.0, %v637
        %v639 = vpop.f32.mrb[0].mxu0
        %640 = vdwg.mxu0
        %v641 = vld [vmem:[#allocation2] sm:$0xff]
        %v643 = vsel %vm567, %v638, 0
        %v646 = vsel %vm567, %v641, 0
        %648 = vmatprep.subr.mxu0 0.0
        %649 = vmatpush1.xpose.msra.mxu0 %v646
        %650 = vmatprep.subr.mxu0 0.0
        %651 = vmatpush1.xpose.msra.mxu0 0.0
        %652 = vmatprep.subr.mxu0 0.0
        %653 = vmatpush1.xpose.msra.mxu0 0.0
        %654 = vmatprep.subr.mxu0 0.0
        %655 = vmatpush1.xpose.msra.mxu0 0.0
        %656 = vmatprep.subr.mxu0 0.0
        %657 = vmatpush1.xpose.msra.mxu0 0.0
        %658 = vmatprep.subr.mxu0 0.0
        %659 = vmatpush1.xpose.msra.mxu0 0.0
        %660 = vmatprep.subr.mxu0 0.0
        %661 = vmatpush1.xpose.msra.mxu0 0.0
        %662 = vmatprep.subr.mxu0 0.0
        %663 = vmatpush1.xpose.msra.mxu0 0.0
        %664 = vmatprep.subr.mxu0 0.0
        %665 = vmatpush1.xpose.msra.mxu0 0.0
        %666 = vmatprep.subr.mxu0 0.0
        %667 = vmatpush1.xpose.msra.mxu0 0.0
        %668 = vmatprep.subr.mxu0 0.0
        %669 = vmatpush1.xpose.msra.mxu0 0.0
        %670 = vmatprep.subr.mxu0 0.0
        %671 = vmatpush1.xpose.msra.mxu0 0.0
        %672 = vmatprep.subr.mxu0 0.0
        %673 = vmatpush1.xpose.msra.mxu0 0.0
        %674 = vmatprep.subr.mxu0 0.0
        %675 = vmatpush1.xpose.msra.mxu0 0.0
        %676 = vmatprep.subr.mxu0 0.0
        %677 = vmatpush1.xpose.msra.mxu0 0.0
        %678 = vmatprep.subr.mxu0 0.0
        %679 = vmatpush1.xpose.msra.mxu0 0.0
        %680 = vmatprep.subr.mxu0 0.0
        %681 = vmatpush1.xpose.msra.mxu0 0.0
        %682 = vmatprep.subr.mxu0 0.0
        %683 = vmatpush1.xpose.msra.mxu0 0.0
        %684 = vmatprep.subr.mxu0 0.0
        %685 = vmatpush1.xpose.msra.mxu0 0.0
        %686 = vmatprep.subr.mxu0 0.0
        %687 = vmatpush1.xpose.msra.mxu0 0.0
        %688 = vmatprep.subr.mxu0 0.0
        %689 = vmatpush1.xpose.msra.mxu0 0.0
        %690 = vmatprep.subr.mxu0 0.0
        %691 = vmatpush1.xpose.msra.mxu0 0.0
        %692 = vmatprep.subr.mxu0 0.0
        %693 = vmatpush1.xpose.msra.mxu0 0.0
        %694 = vmatprep.subr.mxu0 0.0
        %695 = vmatpush1.xpose.msra.mxu0 0.0
        %696 = vmatprep.subr.mxu0 0.0
        %697 = vmatpush1.xpose.msra.mxu0 0.0
        %698 = vmatprep.subr.mxu0 0.0
        %699 = vmatpush1.xpose.msra.mxu0 0.0
        %700 = vmatprep.subr.mxu0 0.0
        %701 = vmatpush1.xpose.msra.mxu0 0.0
        %702 = vmatprep.subr.mxu0 0.0
        %703 = vmatpush1.xpose.msra.mxu0 0.0
        %704 = vmatprep.subr.mxu0 0.0
        %705 = vmatpush1.xpose.msra.mxu0 0.0
        %706 = vmatprep.subr.mxu0 0.0
        %707 = vmatpush1.xpose.msra.mxu0 0.0
        %708 = vmatprep.subr.mxu0 0.0
        %709 = vmatpush1.xpose.msra.mxu0 0.0
        %710 = vmatprep.subr.mxu0 0.0
        %711 = vmatpush1.xpose.msra.mxu0 0.0
        %712 = vmatprep.mubr.f32.mxu0 0.0
        %713 = vmatmul.mubr.f32.gmra.mrb[0].mxu0 %v643
        %v714 = vpop.f32.mrb[0].mxu0
        %v715 = vadd.f32 0.0, %v714
        %v716 = vpop.f32.mrb[0].mxu0
        %717 = vdwg.mxu0
        %v718 = vmul.f32 %v715, 0.17677669
        %vm719 = vcmask 64512
        %v720 = vsel %vm719, %v718, -inf
        %721 = vmax.xlane.f32.xlu0 %v720
        %v722 = vpop.xlane.xlu0 %721
        %v723 = vsub.f32 %v718, %v722
        %v724 = vmul.f32 %v723, 1.442695
        %v725 = vpow.pop %v724
        %v726 = vsel %vm719, %v725, 0.0
        %727 = vadd.xlane.f32.xlu0 %v726
        %v728 = vpop.xlane.xlu0 %727
        %v729 = vrcp.pop %v728
        %v730 = vmul.f32 %v728, %v729
        %v731 = vsub.f32 2.0, %v730
        %v732 = vmul.f32 %v729, %v731
        %v733 = vld [vmem:[#allocation3] sm:$0xff]
        %v735 = vsel %vm719, %v725, 0
        %737 = vmatprep.subr.mxu0 0.0
        %738 = vmatpush1.msra.mxu0 %v733
        %739 = vmatprep.subr.mxu0 0.0
        %740 = vmatpush1.msra.mxu0 0.0
        %741 = vmatprep.subr.mxu0 0.0
        %742 = vmatpush1.msra.mxu0 0.0
        %743 = vmatprep.subr.mxu0 0.0
        %744 = vmatpush1.msra.mxu0 0.0
        %745 = vmatprep.subr.mxu0 0.0
        %746 = vmatpush1.msra.mxu0 0.0
        %747 = vmatprep.subr.mxu0 0.0
        %748 = vmatpush1.msra.mxu0 0.0
        %749 = vmatprep.subr.mxu0 0.0
        %750 = vmatpush1.msra.mxu0 0.0
        %751 = vmatprep.subr.mxu0 0.0
        %752 = vmatpush1.msra.mxu0 0.0
        %753 = vmatprep.subr.mxu0 0.0
        %754 = vmatpush1.msra.mxu0 0.0
        %755 = vmatprep.subr.mxu0 0.0
        %756 = vmatpush1.msra.mxu0 0.0
        %757 = vmatprep.subr.mxu0 0.0
        %758 = vmatpush1.msra.mxu0 0.0
        %759 = vmatprep.subr.mxu0 0.0
        %760 = vmatpush1.msra.mxu0 0.0
        %761 = vmatprep.subr.mxu0 0.0
        %762 = vmatpush1.msra.mxu0 0.0
        %763 = vmatprep.subr.mxu0 0.0
        %764 = vmatpush1.msra.mxu0 0.0
        %765 = vmatprep.subr.mxu0 0.0
        %766 = vmatpush1.msra.mxu0 0.0
        %767 = vmatprep.subr.mxu0 0.0
        %768 = vmatpush1.msra.mxu0 0.0
        %769 = vmatprep.subr.mxu0 0.0
        %770 = vmatpush1.msra.mxu0 0.0
        %771 = vmatprep.subr.mxu0 0.0
        %772 = vmatpush1.msra.mxu0 0.0
        %773 = vmatprep.subr.mxu0 0.0
        %774 = vmatpush1.msra.mxu0 0.0
        %775 = vmatprep.subr.mxu0 0.0
        %776 = vmatpush1.msra.mxu0 0.0
        %777 = vmatprep.subr.mxu0 0.0
        %778 = vmatpush1.msra.mxu0 0.0
        %779 = vmatprep.subr.mxu0 0.0
        %780 = vmatpush1.msra.mxu0 0.0
        %781 = vmatprep.subr.mxu0 0.0
        %782 = vmatpush1.msra.mxu0 0.0
        %783 = vmatprep.subr.mxu0 0.0
        %784 = vmatpush1.msra.mxu0 0.0
        %785 = vmatprep.subr.mxu0 0.0
        %786 = vmatpush1.msra.mxu0 0.0
        %787 = vmatprep.subr.mxu0 0.0
        %788 = vmatpush1.msra.mxu0 0.0
        %789 = vmatprep.subr.mxu0 0.0
        %790 = vmatpush1.msra.mxu0 0.0
        %791 = vmatprep.subr.mxu0 0.0
        %792 = vmatpush1.msra.mxu0 0.0
        %793 = vmatprep.subr.mxu0 0.0
        %794 = vmatpush1.msra.mxu0 0.0
        %795 = vmatprep.subr.mxu0 0.0
        %796 = vmatpush1.msra.mxu0 0.0
        %797 = vmatprep.subr.mxu0 0.0
        %798 = vmatpush1.msra.mxu0 0.0
        %799 = vmatprep.subr.mxu0 0.0
        %800 = vmatpush1.msra.mxu0 0.0
        %801 = vmatprep.mubr.f32.mxu0 0.0
        %802 = vmatmul.mubr.f32.gmra.mrb[0].mxu0 %v735
        %v803 = vpop.f32.mrb[0].mxu0
        %v804 = vadd.f32 0.0, %v803
        %v805 = vpop.f32.mrb[0].mxu0
        %806 = vdwg.mxu0
        %v807 = vmul.f32 %v804, %v732
        %808 = vst.msk [vmem:[%s398] sm:$0xff] %vm567, %v807
        %s809 = sand.u32 %s193, 1
        %s810 = scalar_lea.sflag [#allocation6], %s809
        %s811 = sand.u32 %s193, 1
        %s812 = smul.addr %s811, 8
        %s813 = scalar_lea.vmem [#allocation15], %s812
        // Predicated region
        $region73: #{tpu_custom_call.1} parent=43 // pred_check
          %p814 = pneg %p203
        $region74: #{tpu_custom_call.1} parent=43 // pred_check_branch
          %816 = sbr.rel (%p814) target = $region76
        $region75: #{tpu_custom_call.1} parent=43 // pred_region
          %s818 = ssub.s32 128, 128
          %819 = vsyncadd %s810, %s818
          %s820 = sadd.s32 %s33, %s32
          %s821 = smul.addr %s820, 128
          %s822 = scalar_lea.hbm %s6, %s821
          %s824 = sshll.u32 %s813, 4
          %s825 = int_to_ptr.vmem [resolvable:$true] %s824
          %827 = dma.vmem_to_hbm [thread:$0]  %s825, 128, %s822, %s810
        $region76: #{tpu_custom_call.1} parent=43 // pred_fallthru
          _
      $region44: #{tpu_custom_call.1} parent=5 // pred_fallthru
        _
      %p828 = scmp.le.s32.totalorder 2, %s23
      // Predicated region
      $region77: #{tpu_custom_call.1} parent=5 // pred_check
        %p829 = pneg %p828
      $region78: #{tpu_custom_call.1} parent=5 // pred_check_branch
        %831 = sbr.rel (%p829) target = $region80
      $region79: #{tpu_custom_call.1} parent=5 // pred_region
        %s832 = ssub.s32 %s23, 2
        // Predicated region
        $region81: #{tpu_custom_call.1} parent=79 // pred_check
          %p833 = pneg %p209
        $region82: #{tpu_custom_call.1} parent=79 // pred_check_branch
          %835 = sbr.rel (%p833) target = $region84
        $region83: #{tpu_custom_call.1} parent=79 // pred_region
          %s836 = sand.u32 %s194, 1
          %s837 = scalar_lea.sflag [#allocation6], %s836
          %s838 = sand.u32 %s194, 1
          %s839 = smul.addr %s838, 8
          %s840 = scalar_lea.vmem [#allocation15], %s839
          %841 = dma.done %s837, 128
        $region84: #{tpu_custom_call.1} parent=79 // pred_fallthru
          _
      $region80: #{tpu_custom_call.1} parent=5 // pred_fallthru
        _
    $region6: #{tpu_custom_call.1} parent=1 // loop_footer
      %s27 = sadd.s32 1, %s23
    $region7: #{tpu_custom_call.1} parent=1 // loop_footer_branch
      %22 = sbr.rel target = $region3
    $region8: #{tpu_custom_call.1} parent=1 // loop_exit
      _
    %842 = vsyncpa [#allocation5], 1
    %s843 = scalar_lea.sflag [#allocation5], 1
    %844 = vsyncpa %s843, 1
    %845 = vsyncpa [#allocation8], 1
    %s846 = scalar_lea.sflag [#allocation8], 1
    %847 = vsyncpa %s846, 1
    %848 = vsyncpa [#allocation11], 1
    %849 = vsyncpa [#allocation14], 1
    %850 = vsyncpa [#allocation6], 1
    %s851 = scalar_lea.sflag [#allocation6], 1
    %852 = vsyncpa %s851, 1

</llo_original>
